<compile_context>
chip_gen: v7x
topology: tpu7x:2x2x1
jax: 0.10.0
libtpu: 0.0.40
codegen_flags: <defaults>
</compile_context>

<pallas_src>
import functools

import jax
import jax.numpy as jnp
from jax.experimental import pallas as pl
from jax.experimental.pallas import tpu as pltpu

LEAKY_SLOPE = 0.01  # nn.LeakyReLU default negative_slope


def _make_kernel(C, L, tb, compute_dtype, slope=LEAKY_SLOPE):
    """Kernel over one (tb, C, L) block of samples in the native layout."""

    def kernel(x_ref, w1_ref, w2_ref, bn_ref, o_ref, rhs_ref):
        # Keep-masks reproduce the conv zero padding (k=3, pad=1) at the sequence boundaries.
        col = jax.lax.broadcasted_iota(jnp.int32, (1, L), 1)
        lk = (col != 0).astype(compute_dtype)        # zero at t == 0     (for the h[t-1] tap)
        rk = (col != L - 1).astype(compute_dtype)    # zero at t == L - 1 (for the h[t+1] tap)

        def bn_act(h, c):
            s = bn_ref[:, c:c + 1]                   # (C, 1), broadcasts over lanes
            b = bn_ref[:, c + 1:c + 2]
            h = h * s + b
            return jnp.maximum(h, slope * h)         # LeakyReLU (slope < 1)

        def conv3(h, w_ref):
            # k=3 / pad=1 conv as ONE MXU matmul: y = [W0 | W1 | W2] @ [h_prev ; h ; h_next],
            # with the 3-tap RHS staged in a persistent VMEM scratch (no concatenate).
            hb = h.astype(compute_dtype)                                        # (C, L)
            rhs_ref[C:2 * C, :] = hb
            rhs_ref[0:C, :] = pltpu.roll(hb, shift=1, axis=1) * lk              # h[:, t-1]
            rhs_ref[2 * C:3 * C, :] = pltpu.roll(hb, shift=L - 1, axis=1) * rk  # h[:, t+1]
            return jnp.dot(w_ref[...], rhs_ref[...],
                           preferred_element_type=jnp.float32)                  # (C, L) f32

        @pl.loop(0, tb)
        def _(s):
            h = bn_act(x_ref[s].astype(jnp.float32), 0)     # BN1 -> LeakyReLU
            h = conv3(h, w1_ref)                            # Conv1
            h = bn_act(h, 2)                                # BN2 -> LeakyReLU
            h = conv3(h, w2_ref)                            # Conv2
            # Residual: re-read x from the VMEM-resident block (not kept live across the convs).
            o_ref[s] = (x_ref[s].astype(jnp.float32) + h).astype(o_ref.dtype)

    return kernel


def _vmem_capacity_bytes():
    try:
        return int(pltpu.get_tpu_info().vmem_capacity_bytes)
    except Exception:
        return 64 * 1024 * 1024      # conservative fallback: v7x per-TensorCore VMEM


def _per_step_vmem_bytes(tb, C, L, io_bytes, cd_bytes):
    """Approximate VMEM footprint of one grid step."""
    return (2 * 2 * tb * C * L * io_bytes      # x / out blocks, double-buffered pipeline
            + 2 * 3 * C * C * cd_bytes         # two fused weight slabs, single-buffered
            + 4 * C * 4                        # folded BN params (f32)
            + 3 * C * L * cd_bytes             # (3C, L) RHS scratch
            + 8 * C * L * 4)                   # h / rolled taps / matmul result / residual temps


def _pick_tb(N, C, L, io_bytes, cd_bytes, budget_bytes):
    """Largest divisor tb of N fitting the VMEM budget; prefer a grid with >= 2 steps so a
    2-TensorCore chip (v7x) can shard the batch axis via dimension_semantics=('parallel',)."""
    divisors = [d for d in range(1, N + 1) if N % d == 0]
    preferred = [d for d in divisors if N // d >= 2] or divisors
    fitting = [d for d in preferred
               if _per_step_vmem_bytes(d, C, L, io_bytes, cd_bytes) <= budget_bytes]
    return max(fitting) if fitting else 1


def _grid_invariant_spec(shape, index_map):
    """Single-buffered BlockSpec for operands whose block never changes across grid steps."""
    try:
        return pl.BlockSpec(shape, index_map, pipeline_mode=pl.Buffered(1))
    except (TypeError, AttributeError):   # older BlockSpec signature without pipeline_mode
        return pl.BlockSpec(shape, index_map)


@functools.partial(jax.jit, static_argnames=("compute_dtype",))
def conv1d_block(x, w1, w2, scale1, shift1, scale2, shift2, *, compute_dtype=jnp.bfloat16):
    """x: (N, C, L). w1, w2: (C, C, 3) Conv1d weights (bias=False). scale/shift: folded BN, (C,).

    compute_dtype=bfloat16 is the fast path on all TPU generations (bf16 MXU operands with f32
    accumulation).  compute_dtype=float32 is a correctness-only path (emulated f32 matmul).
    """
    N, C, L = x.shape
    out_dtype = x.dtype

    # Fuse the 3 conv taps into one (C, 3C) weight slab -> each conv is a single K=3C matmul.
    def fuse(w):
        return jnp.concatenate([w[:, :, 0], w[:, :, 1], w[:, :, 2]], axis=1).astype(compute_dtype)

    w1c = fuse(w1)
    w2c = fuse(w2)

    # Both BN layers folded into one (C, 4) tile: [scale1, shift1, scale2, shift2].
    bn = jnp.stack([scale1, shift1, scale2, shift2], axis=1).astype(jnp.float32)

    io_bytes = jnp.dtype(x.dtype).itemsize
    cd_bytes = jnp.dtype(compute_dtype).itemsize

    # Generation-aware VMEM budget (v5e/v6e: 128 MiB, v7x: 64 MiB) with headroom for Mosaic
    # internal scratch.
    capacity = _vmem_capacity_bytes()
    budget = max(capacity - 16 * 1024 * 1024, 24 * 1024 * 1024)

    tb = _pick_tb(N, C, L, io_bytes, cd_bytes, budget)
    need = _per_step_vmem_bytes(tb, C, L, io_bytes, cd_bytes)
    vmem_limit = int(min(budget, max(32 * 1024 * 1024, 2 * need)))

    grid = (N // tb,)
    act_spec = pl.BlockSpec((tb, C, L), lambda i: (i, 0, 0))
    w_spec = _grid_invariant_spec((C, 3 * C), lambda i: (0, 0))
    bn_spec = _grid_invariant_spec((C, 4), lambda i: (0, 0))

    return pl.pallas_call(
        _make_kernel(C, L, tb, compute_dtype),
        out_shape=jax.ShapeDtypeStruct((N, C, L), out_dtype),
        grid=grid,
        in_specs=[act_spec, w_spec, w_spec, bn_spec],
        out_specs=act_spec,
        scratch_shapes=[pltpu.VMEM((3 * C, L), compute_dtype)],
        compiler_params=pltpu.CompilerParams(
            dimension_semantics=("parallel",),
            vmem_limit_bytes=vmem_limit,
        ),
    )(x, w1c, w2c, bn)


def reference(x, w1, w2, scale1, shift1, scale2, shift2, slope=LEAKY_SLOPE):
    """Pure-JAX f32 reference with the same (folded-BN, eval-mode) semantics."""

    def bn_act(h, s, b):
        h = h * s[None, :, None] + b[None, :, None]
        return jnp.where(h >= 0, h, slope * h)

    def conv(h, w):
        return jax.lax.conv_general_dilated(
            h, w, window_strides=(1,), padding=((1, 1),),
            dimension_numbers=("NCH", "OIH", "NCH"))

    h = bn_act(x, scale1, shift1)
    h = conv(h, w1)
    h = bn_act(h, scale2, shift2)
    h = conv(h, w2)
    return x + h


if __name__ == "__main__":
    # Small shapes; C is sublane-aligned and L is lane-dense (128), batch > 1 so the grid has
    # at least 2 steps (megacore-friendly).
    N, C, L = 4, 16, 128
    key = jax.random.PRNGKey(0)
    kx, kw1, kw2, kg1, kb1, km1, kv1, kg2, kb2, km2, kv2 = jax.random.split(key, 11)

    x = jax.random.normal(kx, (N, C, L), dtype=jnp.float32)

    # Conv1d weights: (C_out, C_in, kernel=3), bias=False
    w1 = jax.random.normal(kw1, (C, C, 3), dtype=jnp.float32) * 0.25
    w2 = jax.random.normal(kw2, (C, C, 3), dtype=jnp.float32) * 0.25

    eps = 1e-5

    def fold_bn(kg, kb, km, kv):
        gamma = 1.0 + 0.1 * jax.random.normal(kg, (C,), dtype=jnp.float32)
        beta = 0.1 * jax.random.normal(kb, (C,), dtype=jnp.float32)
        rmean = 0.1 * jax.random.normal(km, (C,), dtype=jnp.float32)
        rvar = jnp.abs(jax.random.normal(kv, (C,), dtype=jnp.float32)) + 0.5
        scale = gamma / jnp.sqrt(rvar + eps)
        shift = beta - rmean * scale
        return scale, shift

    scale1, shift1 = fold_bn(kg1, kb1, km1, kv1)
    scale2, shift2 = fold_bn(kg2, kb2, km2, kv2)

    ref = jax.block_until_ready(reference(x, w1, w2, scale1, shift1, scale2, shift2))

    # Correctness-only path (f32 MXU): tight check against the eval-mode module reference.
    out_f32 = jax.block_until_ready(
        conv1d_block(x, w1, w2, scale1, shift1, scale2, shift2, compute_dtype=jnp.float32))
    assert out_f32.shape == (N, C, L), out_f32.shape
    assert jnp.allclose(out_f32, ref, rtol=1e-3, atol=2e-3), (
        float(jnp.max(jnp.abs(out_f32 - ref))))

    # Production fast path (bf16 MXU operands, f32 accumulation): loose tolerance for bf16 quant.
    out_bf16 = jax.block_until_ready(
        conv1d_block(x, w1, w2, scale1, shift1, scale2, shift2, compute_dtype=jnp.bfloat16))
    assert out_bf16.shape == (N, C, L), out_bf16.shape
    assert jnp.allclose(out_bf16, ref, rtol=1e-1, atol=1e-1), (
        float(jnp.max(jnp.abs(out_bf16 - ref))))

    print("KERNEL_OK")
</pallas_src>

<mosaic_0001>
module attributes {stable_mosaic.version = 11 : i64} {
  func.func @kernel(%arg0: i32, %arg1: memref<2x16x128xf32, #tpu.memory_space<vmem>>, %arg2: memref<16x48xf32, #tpu.memory_space<vmem>>, %arg3: memref<16x48xf32, #tpu.memory_space<vmem>>, %arg4: memref<16x4xf32, #tpu.memory_space<vmem>>, %arg5: memref<2x16x128xf32, #tpu.memory_space<vmem>>, %arg6: memref<48x128xf32, #tpu.memory_space<vmem>>) attributes {dimension_semantics = [#tpu.dimension_semantics<parallel>], iteration_bounds = array<i64: 2>, scalar_prefetch = 0 : i64, scratch_operands = 1 : i64, tpu.core_type = #tpu.core_type<tc>, window_params = [{transform_indices = @transform_0, window_bounds = array<i64: 2, 16, 128>}, {pipeline_mode = #tpu.pipeline_mode<synchronous>, transform_indices = @transform_1, window_bounds = array<i64: 16, 48>}, {pipeline_mode = #tpu.pipeline_mode<synchronous>, transform_indices = @transform_2, window_bounds = array<i64: 16, 48>}, {pipeline_mode = #tpu.pipeline_mode<synchronous>, transform_indices = @transform_3, window_bounds = array<i64: 16, 4>}, {transform_indices = @transform_4, window_bounds = array<i64: 2, 16, 128>}]} {
    %0 = tpu.iota {dimensions = array<i32: 1>} : vector<1x128xi32>
    %c0_i32 = arith.constant 0 : i32
    %1 = vector.broadcast %c0_i32 : i32 to vector<1x128xi32>
    %2 = arith.cmpi ne, %0, %1 : vector<1x128xi32>
    %3 = arith.extui %2 : vector<1x128xi1> to vector<1x128xi32>
    %4 = arith.sitofp %3 : vector<1x128xi32> to vector<1x128xf32>
    %c127_i32 = arith.constant 127 : i32
    %5 = vector.broadcast %c127_i32 : i32 to vector<1x128xi32>
    %6 = arith.cmpi ne, %0, %5 : vector<1x128xi32>
    %7 = arith.extui %6 : vector<1x128xi1> to vector<1x128xi32>
    %8 = arith.sitofp %7 : vector<1x128xi32> to vector<1x128xf32>
    %c0_i32_0 = arith.constant 0 : i32
    %c2_i32 = arith.constant 2 : i32
    %9 = arith.addi %c0_i32_0, %c2_i32 : i32
    %c1_i32 = arith.constant 1 : i32
    scf.for %arg7 = %c0_i32_0 to %9 step %c1_i32  : i32 {
      %c1_i32_2 = arith.constant 1 : i32
      %10 = arith.muli %arg7, %c1_i32_2 : i32
      %c0_i32_3 = arith.constant 0 : i32
      %11 = arith.addi %c0_i32_3, %10 : i32
      %12 = arith.index_cast %11 : i32 to index
      %c0 = arith.constant 0 : index
      %c0_4 = arith.constant 0 : index
      %13 = vector.load %arg1[%12, %c0, %c0_4] : memref<2x16x128xf32, #tpu.memory_space<vmem>>, vector<1x16x128xf32>
      %14 = vector.shape_cast %13 : vector<1x16x128xf32> to vector<16x128xf32>
      %c0_5 = arith.constant 0 : index
      %c0_6 = arith.constant 0 : index
      %15 = vector.load %arg4[%c0_5, %c0_6] : memref<16x4xf32, #tpu.memory_space<vmem>>, vector<16x1xf32>
      %c0_7 = arith.constant 0 : index
      %c1 = arith.constant 1 : index
      %16 = vector.load %arg4[%c0_7, %c1] : memref<16x4xf32, #tpu.memory_space<vmem>>, vector<16x1xf32>
      %17 = vector.broadcast %15 : vector<16x1xf32> to vector<16x128xf32>
      %18 = arith.mulf %14, %17 : vector<16x128xf32>
      %19 = vector.broadcast %16 : vector<16x1xf32> to vector<16x128xf32>
      %20 = arith.addf %18, %19 : vector<16x128xf32>
      %cst = arith.constant 0.00999999977 : f32
      %21 = vector.broadcast %cst : f32 to vector<16x128xf32>
      %22 = arith.mulf %21, %20 : vector<16x128xf32>
      %23 = arith.maximumf %20, %22 : vector<16x128xf32>
      %c16 = arith.constant 16 : index
      %c0_8 = arith.constant 0 : index
      %24 = vector.load %arg6[%c16, %c0_8] : memref<48x128xf32, #tpu.memory_space<vmem>>, vector<16x128xf32>
      tpu.vector_store %arg6[%c16, %c0_8], %23 {strides = array<i32>} : memref<48x128xf32, #tpu.memory_space<vmem>>, vector<16x128xf32>,
      %c1_i32_9 = arith.constant 1 : i32
      %25 = tpu.dynamic_rotate %23 by %c1_i32_9 dim 1 : vector<16x128xf32>, i32 -> vector<16x128xf32>
      %26 = vector.broadcast %4 : vector<1x128xf32> to vector<16x128xf32>
      %27 = arith.mulf %25, %26 : vector<16x128xf32>
      %c0_10 = arith.constant 0 : index
      %c0_11 = arith.constant 0 : index
      %28 = vector.load %arg6[%c0_10, %c0_11] : memref<48x128xf32, #tpu.memory_space<vmem>>, vector<16x128xf32>
      tpu.vector_store %arg6[%c0_10, %c0_11], %27 {strides = array<i32>} : memref<48x128xf32, #tpu.memory_space<vmem>>, vector<16x128xf32>,
      %c127_i32_12 = arith.constant 127 : i32
      %29 = tpu.dynamic_rotate %23 by %c127_i32_12 dim 1 : vector<16x128xf32>, i32 -> vector<16x128xf32>
      %30 = vector.broadcast %8 : vector<1x128xf32> to vector<16x128xf32>
      %31 = arith.mulf %29, %30 : vector<16x128xf32>
      %c32 = arith.constant 32 : index
      %c0_13 = arith.constant 0 : index
      %32 = vector.load %arg6[%c32, %c0_13] : memref<48x128xf32, #tpu.memory_space<vmem>>, vector<16x128xf32>
      tpu.vector_store %arg6[%c32, %c0_13], %31 {strides = array<i32>} : memref<48x128xf32, #tpu.memory_space<vmem>>, vector<16x128xf32>,
      %c0_14 = arith.constant 0 : index
      %c0_15 = arith.constant 0 : index
      %33 = vector.load %arg2[%c0_14, %c0_15] : memref<16x48xf32, #tpu.memory_space<vmem>>, vector<16x48xf32>
      %c0_16 = arith.constant 0 : index
      %c0_17 = arith.constant 0 : index
      %34 = vector.load %arg6[%c0_16, %c0_17] : memref<48x128xf32, #tpu.memory_space<vmem>>, vector<48x128xf32>
      %cst_18 = arith.constant dense<0.000000e+00> : vector<16x128xf32>
      %35 = tpu.matmul %33, %34, %cst_18 {dimension_numbers = #tpu.dot_dimension_numbers<[1], [0], [0], [1], [0, 0, 1, 1], [], []>} : vector<16x48xf32>, vector<48x128xf32>, vector<16x128xf32> -> vector<16x128xf32>
      %c0_19 = arith.constant 0 : index
      %c2 = arith.constant 2 : index
      %36 = vector.load %arg4[%c0_19, %c2] : memref<16x4xf32, #tpu.memory_space<vmem>>, vector<16x1xf32>
      %c0_20 = arith.constant 0 : index
      %c3 = arith.constant 3 : index
      %37 = vector.load %arg4[%c0_20, %c3] : memref<16x4xf32, #tpu.memory_space<vmem>>, vector<16x1xf32>
      %38 = vector.broadcast %36 : vector<16x1xf32> to vector<16x128xf32>
      %39 = arith.mulf %35, %38 : vector<16x128xf32>
      %40 = vector.broadcast %37 : vector<16x1xf32> to vector<16x128xf32>
      %41 = arith.addf %39, %40 : vector<16x128xf32>
      %cst_21 = arith.constant 0.00999999977 : f32
      %42 = vector.broadcast %cst_21 : f32 to vector<16x128xf32>
      %43 = arith.mulf %42, %41 : vector<16x128xf32>
      %44 = arith.maximumf %41, %43 : vector<16x128xf32>
      %c16_22 = arith.constant 16 : index
      %c0_23 = arith.constant 0 : index
      %45 = vector.load %arg6[%c16_22, %c0_23] : memref<48x128xf32, #tpu.memory_space<vmem>>, vector<16x128xf32>
      tpu.vector_store %arg6[%c16_22, %c0_23], %44 {strides = array<i32>} : memref<48x128xf32, #tpu.memory_space<vmem>>, vector<16x128xf32>,
      %c1_i32_24 = arith.constant 1 : i32
      %46 = tpu.dynamic_rotate %44 by %c1_i32_24 dim 1 : vector<16x128xf32>, i32 -> vector<16x128xf32>
      %47 = vector.broadcast %4 : vector<1x128xf32> to vector<16x128xf32>
      %48 = arith.mulf %46, %47 : vector<16x128xf32>
      %c0_25 = arith.constant 0 : index
      %c0_26 = arith.constant 0 : index
      %49 = vector.load %arg6[%c0_25, %c0_26] : memref<48x128xf32, #tpu.memory_space<vmem>>, vector<16x128xf32>
      tpu.vector_store %arg6[%c0_25, %c0_26], %48 {strides = array<i32>} : memref<48x128xf32, #tpu.memory_space<vmem>>, vector<16x128xf32>,
      %c127_i32_27 = arith.constant 127 : i32
      %50 = tpu.dynamic_rotate %44 by %c127_i32_27 dim 1 : vector<16x128xf32>, i32 -> vector<16x128xf32>
      %51 = vector.broadcast %8 : vector<1x128xf32> to vector<16x128xf32>
      %52 = arith.mulf %50, %51 : vector<16x128xf32>
      %c32_28 = arith.constant 32 : index
      %c0_29 = arith.constant 0 : index
      %53 = vector.load %arg6[%c32_28, %c0_29] : memref<48x128xf32, #tpu.memory_space<vmem>>, vector<16x128xf32>
      tpu.vector_store %arg6[%c32_28, %c0_29], %52 {strides = array<i32>} : memref<48x128xf32, #tpu.memory_space<vmem>>, vector<16x128xf32>,
      %c0_30 = arith.constant 0 : index
      %c0_31 = arith.constant 0 : index
      %54 = vector.load %arg3[%c0_30, %c0_31] : memref<16x48xf32, #tpu.memory_space<vmem>>, vector<16x48xf32>
      %c0_32 = arith.constant 0 : index
      %c0_33 = arith.constant 0 : index
      %55 = vector.load %arg6[%c0_32, %c0_33] : memref<48x128xf32, #tpu.memory_space<vmem>>, vector<48x128xf32>
      %cst_34 = arith.constant dense<0.000000e+00> : vector<16x128xf32>
      %56 = tpu.matmul %54, %55, %cst_34 {dimension_numbers = #tpu.dot_dimension_numbers<[1], [0], [0], [1], [0, 0, 1, 1], [], []>} : vector<16x48xf32>, vector<48x128xf32>, vector<16x128xf32> -> vector<16x128xf32>
      %57 = arith.index_cast %11 : i32 to index
      %c0_35 = arith.constant 0 : index
      %c0_36 = arith.constant 0 : index
      %58 = vector.load %arg1[%57, %c0_35, %c0_36] : memref<2x16x128xf32, #tpu.memory_space<vmem>>, vector<1x16x128xf32>
      %59 = vector.shape_cast %58 : vector<1x16x128xf32> to vector<16x128xf32>
      %60 = arith.addf %59, %56 : vector<16x128xf32>
      %61 = arith.index_cast %11 : i32 to index
      %c0_37 = arith.constant 0 : index
      %c0_38 = arith.constant 0 : index
      %62 = vector.load %arg5[%61, %c0_37, %c0_38] : memref<2x16x128xf32, #tpu.memory_space<vmem>>, vector<1x16x128xf32>
      %63 = vector.shape_cast %62 : vector<1x16x128xf32> to vector<16x128xf32>
      %64 = vector.shape_cast %60 : vector<16x128xf32> to vector<1x16x128xf32>
      tpu.vector_store %arg5[%61, %c0_37, %c0_38], %64 {strides = array<i32>} : memref<2x16x128xf32, #tpu.memory_space<vmem>>, vector<1x16x128xf32>,
    }
    %c2_i32_1 = arith.constant 2 : i32
    return
  }
  func.func @transform_0(%arg0: i32) -> (i32, i32, i32) {
    %c0_i32 = arith.constant 0 : i32
    %c0_i32_0 = arith.constant 0 : i32
    %c0_i32_1 = arith.constant 0 : i32
    return %arg0, %c0_i32, %c0_i32_0 : i32, i32, i32
  }
  func.func @transform_1(%arg0: i32) -> (i32, i32) {
    %c0_i32 = arith.constant 0 : i32
    %c0_i32_0 = arith.constant 0 : i32
    %c0_i32_1 = arith.constant 0 : i32
    return %c0_i32, %c0_i32_0 : i32, i32
  }
  func.func @transform_2(%arg0: i32) -> (i32, i32) {
    %c0_i32 = arith.constant 0 : i32
    %c0_i32_0 = arith.constant 0 : i32
    %c0_i32_1 = arith.constant 0 : i32
    return %c0_i32, %c0_i32_0 : i32, i32
  }
  func.func @transform_3(%arg0: i32) -> (i32, i32) {
    %c0_i32 = arith.constant 0 : i32
    %c0_i32_0 = arith.constant 0 : i32
    %c0_i32_1 = arith.constant 0 : i32
    return %c0_i32, %c0_i32_0 : i32, i32
  }
  func.func @transform_4(%arg0: i32) -> (i32, i32, i32) {
    %c0_i32 = arith.constant 0 : i32
    %c0_i32_0 = arith.constant 0 : i32
    %c0_i32_1 = arith.constant 0 : i32
    return %arg0, %c0_i32, %c0_i32_0 : i32, i32, i32
  }
}

</mosaic_0001>

<llo_original>
// kernel: conv1d_block.1
$region0: #{conv1d_block.1}
  #allocation0 [shape = 'u32[]', space=smem, size = 0x4, offset = 0x4, fixed_abs, tag = 'smem constant byte address 0x4 - core index']
  #allocation1 [shape = 'u32[144,128]{1,0:T(1,128)}', space=vmem, size = 0x12000, scoped, tag = 'internal scratch']
  #allocation2 [shape = 'f32[48,128]{1,0:T(8,128)}', space=vmem, size = 0x6000, scoped, tag = 'scratch operand']
  %s0 = inlined_call_operand.vmem [shape: f32[4,16,128], index: 0, kind: input, shape index: {}]
  %s1 = inlined_call_operand.vmem [shape: f32[16,48], index: 1, kind: input, shape index: {}]
  %s2 = inlined_call_operand.vmem [shape: f32[16,48], index: 2, kind: input, shape index: {}]
  %s3 = inlined_call_operand.vmem [shape: f32[16,4], index: 3, kind: input, shape index: {}]
  %s4 = inlined_call_operand.hbm [shape: f32[4,16,128], index: 4, kind: output, shape index: {}]
  %s5 = sld [smem:[#allocation0]]
  $region56: #{conv1d_block.1} parent=0
    _
  %s7 = ssub.s32 1, %s5
  %s8 = scalar_select 0, %s7, %s5
  $region1: #{conv1d_block.1} parent=0
    #allocation3 [shape = 'u8[32768]{0}', space=vmem, size = 0x8000, scoped, tag = 'output window, operand 0']
    #allocation4 [shape = 's32[2]{0}', space=sflag, size = 0x8, scoped, tag = 'scoped memory for conv1d_block.1']
    %9 = vsyncpa [#allocation4], 0
    %s10 = scalar_lea.sflag [#allocation4], 1
    %11 = vsyncpa %s10, 0
    loop: start=0, step=1, limit=4
    $region2: #{conv1d_block.1} parent=1 // loop_pre_header
      _
    $region3: #{conv1d_block.1} parent=1 // loop_header
      %s13 = sphi 0, %s17
      %p14 = scmp.ge.s32.totalorder %s13, 4
      %s23 = sphi 0, %s25
      %s26 = sphi 0, %s23
      %s27 = sphi 0, %s26
      %s43 = sphi 0, %s27
      %s47 = sphi 0, %s47
      %s49 = sphi 0, %s47
      %s50 = sphi 0, %s49
      %s64 = sphi 0, %s50
      %s68 = sphi 0, %s68
      %s70 = sphi 0, %s68
      %s71 = sphi 0, %s70
      %s85 = sphi 0, %s71
      %s89 = sphi 0, %s89
      %s91 = sphi 0, %s89
      %s92 = sphi 0, %s91
      %s106 = sphi 0, %s92
      %s112 = sphi 0, %s114
      %s115 = sphi 0, %s112
      %s116 = sphi 0, %s115
      %s132 = sphi 0, %s116
    $region4: #{conv1d_block.1} parent=1 // loop_header_branch
      %16 = sbr.rel (%p14) target = $region8
    $region5: #{conv1d_block.1} parent=1 // loop_body
      %s18 = ssub.s32 %s13, 1
      %s19 = ssub.s32 %s13, 2
      %s20 = sadd.s32 %s13, 1
      %s21 = ssub.s32 %s13, %s20
      %p22 = scmp.eq.s32.totalorder %s21, 0
      %s24 = sadd.s32 %s23, 1
      %s25 = scalar_select %p22, %s23, %s24
      %p28 = pneg %p22
      %p29 = scmp.eq.s32.totalorder %s13, 1
      %p30 = por %p28, %p29
      %p31 = scmp.ne.s32.totalorder %s23, %s26
      %p32 = scmp.eq.s32.totalorder %s13, 0
      %p33 = por %p31, %p32
      %p34 = scmp.ne.s32.totalorder %s23, %s26
      %p35 = scmp.eq.s32.totalorder %s18, 1
      %p36 = por %p34, %p35
      %p37 = scmp.ne.s32.totalorder %s26, %s27
      %p38 = scmp.eq.s32.totalorder %s18, 0
      %p39 = por %p37, %p38
      %p40 = scmp.ne.s32.totalorder %s26, %s27
      %p41 = scmp.eq.s32.totalorder %s19, 1
      %p42 = por %p40, %p41
      %p44 = scmp.ne.s32.totalorder %s27, %s43
      %p45 = scmp.eq.s32.totalorder %s19, 0
      %p46 = por %p44, %p45
      %s48 = sadd.s32 %s47, 1
      %p51 = scmp.eq.s32.totalorder %s13, 1
      %p52 = scmp.ne.s32.totalorder %s47, %s49
      %p53 = scmp.eq.s32.totalorder %s13, 0
      %p54 = por %p52, %p53
      %p55 = scmp.ne.s32.totalorder %s47, %s49
      %p56 = scmp.eq.s32.totalorder %s18, 1
      %p57 = por %p55, %p56
      %p58 = scmp.ne.s32.totalorder %s49, %s50
      %p59 = scmp.eq.s32.totalorder %s18, 0
      %p60 = por %p58, %p59
      %p61 = scmp.ne.s32.totalorder %s49, %s50
      %p62 = scmp.eq.s32.totalorder %s19, 1
      %p63 = por %p61, %p62
      %p65 = scmp.ne.s32.totalorder %s50, %s64
      %p66 = scmp.eq.s32.totalorder %s19, 0
      %p67 = por %p65, %p66
      %s69 = sadd.s32 %s68, 1
      %p72 = scmp.eq.s32.totalorder %s13, 1
      %p73 = scmp.ne.s32.totalorder %s68, %s70
      %p74 = scmp.eq.s32.totalorder %s13, 0
      %p75 = por %p73, %p74
      %p76 = scmp.ne.s32.totalorder %s68, %s70
      %p77 = scmp.eq.s32.totalorder %s18, 1
      %p78 = por %p76, %p77
      %p79 = scmp.ne.s32.totalorder %s70, %s71
      %p80 = scmp.eq.s32.totalorder %s18, 0
      %p81 = por %p79, %p80
      %p82 = scmp.ne.s32.totalorder %s70, %s71
      %p83 = scmp.eq.s32.totalorder %s19, 1
      %p84 = por %p82, %p83
      %p86 = scmp.ne.s32.totalorder %s71, %s85
      %p87 = scmp.eq.s32.totalorder %s19, 0
      %p88 = por %p86, %p87
      %s90 = sadd.s32 %s89, 1
      %p93 = scmp.eq.s32.totalorder %s13, 1
      %p94 = scmp.ne.s32.totalorder %s89, %s91
      %p95 = scmp.eq.s32.totalorder %s13, 0
      %p96 = por %p94, %p95
      %p97 = scmp.ne.s32.totalorder %s89, %s91
      %p98 = scmp.eq.s32.totalorder %s18, 1
      %p99 = por %p97, %p98
      %p100 = scmp.ne.s32.totalorder %s91, %s92
      %p101 = scmp.eq.s32.totalorder %s18, 0
      %p102 = por %p100, %p101
      %p103 = scmp.ne.s32.totalorder %s91, %s92
      %p104 = scmp.eq.s32.totalorder %s19, 1
      %p105 = por %p103, %p104
      %p107 = scmp.ne.s32.totalorder %s92, %s106
      %p108 = scmp.eq.s32.totalorder %s19, 0
      %p109 = por %p107, %p108
      %s110 = ssub.s32 %s13, %s20
      %p111 = scmp.eq.s32.totalorder %s110, 0
      %s113 = sadd.s32 %s112, 1
      %s114 = scalar_select %p111, %s112, %s113
      %p117 = pneg %p111
      %p118 = scmp.eq.s32.totalorder %s13, 1
      %p119 = por %p117, %p118
      %p120 = scmp.ne.s32.totalorder %s112, %s115
      %p121 = scmp.eq.s32.totalorder %s13, 0
      %p122 = por %p120, %p121
      %p123 = scmp.ne.s32.totalorder %s112, %s115
      %p124 = scmp.eq.s32.totalorder %s18, 1
      %p125 = por %p123, %p124
      %p126 = scmp.ne.s32.totalorder %s115, %s116
      %p127 = scmp.eq.s32.totalorder %s18, 0
      %p128 = por %p126, %p127
      %p129 = scmp.ne.s32.totalorder %s115, %s116
      %p130 = scmp.eq.s32.totalorder %s19, 1
      %p131 = por %p129, %p130
      %p133 = scmp.ne.s32.totalorder %s116, %s132
      %p134 = scmp.eq.s32.totalorder %s19, 0
      %p135 = por %p133, %p134
      %p136 = scmp.le.s32.totalorder 1, %s13
      %p137 = scmp.lt.s32.totalorder %s13, 3
      %p138 = pnand %p136, %p137
      %p139 = pneg %p138
      // Predicated region
      $region9: #{conv1d_block.1} parent=5 // pred_check
        _
      $region10: #{conv1d_block.1} parent=5 // pred_check_branch
        %141 = sbr.rel (%p138) target = $region12
      $region11: #{conv1d_block.1} parent=5 // pred_region
        %s142 = ssub.s32 %s13, 1
        // Predicated region
        $region13: #{conv1d_block.1} parent=11 // pred_check
          %p143 = pneg %p60
        $region14: #{conv1d_block.1} parent=11 // pred_check_branch
          %145 = sbr.rel (%p143) target = $region16
        $region15: #{conv1d_block.1} parent=11 // pred_region
          _
        $region16: #{conv1d_block.1} parent=11 // pred_fallthru
          _
        // Predicated region
        $region17: #{conv1d_block.1} parent=11 // pred_check
          %p146 = pneg %p81
        $region18: #{conv1d_block.1} parent=11 // pred_check_branch
          %148 = sbr.rel (%p146) target = $region20
        $region19: #{conv1d_block.1} parent=11 // pred_region
          _
        $region20: #{conv1d_block.1} parent=11 // pred_fallthru
          _
        // Predicated region
        $region21: #{conv1d_block.1} parent=11 // pred_check
          %p149 = pneg %p102
        $region22: #{conv1d_block.1} parent=11 // pred_check_branch
          %151 = sbr.rel (%p149) target = $region24
        $region23: #{conv1d_block.1} parent=11 // pred_region
          _
        $region24: #{conv1d_block.1} parent=11 // pred_fallthru
          _
      $region12: #{conv1d_block.1} parent=5 // pred_fallthru
        _
      %p152 = scmp.lt.s32.totalorder %s13, 2
      // Predicated region
      $region25: #{conv1d_block.1} parent=5 // pred_check
        %p153 = pneg %p152
      $region26: #{conv1d_block.1} parent=5 // pred_check_branch
        %155 = sbr.rel (%p153) target = $region28
      $region27: #{conv1d_block.1} parent=5 // pred_region
        // Predicated region
        $region29: #{conv1d_block.1} parent=27 // pred_check
          %p156 = pneg %p33
        $region30: #{conv1d_block.1} parent=27 // pred_check_branch
          %158 = sbr.rel (%p156) target = $region32
        $region31: #{conv1d_block.1} parent=27 // pred_region
          %s159 = smul.u32 2, %s13
          %p160 = scmp.lt.s32.totalorder %s159, 3
          %s161 = scalar_select %p160, %s159, 3
          %s162 = smul.addr %s161, 2
          %s163 = smul.addr %s162, 8
          %s164 = scalar_lea.vmem %s0, %s163
          %s165 = smul.u32 2, %s13
        $region32: #{conv1d_block.1} parent=27 // pred_fallthru
          _
      $region28: #{conv1d_block.1} parent=5 // pred_fallthru
        _
      %p166 = scmp.le.s32.totalorder 1, %s13
      %p167 = scmp.lt.s32.totalorder %s13, 3
      %p168 = pnand %p166, %p167
      %p169 = pneg %p168
      // Predicated region
      $region33: #{conv1d_block.1} parent=5 // pred_check
        _
      $region34: #{conv1d_block.1} parent=5 // pred_check_branch
        %171 = sbr.rel (%p168) target = $region36
      $region35: #{conv1d_block.1} parent=5 // pred_region
        %s172 = ssub.s32 %s13, 1
        %s173 = smul.u32 2, %s18
        %p174 = scmp.lt.s32.totalorder %s173, 3
        %s175 = scalar_select %p174, %s173, 3
        %s176 = smul.addr %s175, 2
        %s177 = smul.addr %s176, 8
        %s178 = scalar_lea.vmem %s0, %s177
        %p179 = pneg %p39
        %p180 = pneg %p36
        %p181 = pneg %p60
        %p182 = pneg %p57
        %p183 = pneg %p81
        %p184 = pneg %p78
        %p185 = pneg %p102
        %p186 = pneg %p99
        %p187 = pneg %p128
        %p188 = pneg %p125
        %s189 = sand.u32 %s115, 1
        %s190 = scalar_lea.sflag [#allocation4], %s189
        %s191 = sand.u32 %s115, 1
        %s192 = smul.addr %s191, 32
        %s193 = scalar_lea.vmem [#allocation3], %s192
        %s194 = smul.u32 2, %s18
        %p195 = scmp.lt.s32.totalorder %s194, 3
        %s196 = scalar_select %p195, %s194, 3
        %s197 = smul.addr %s196, 2
        %s198 = smul.addr %s197, 8
        %s199 = scalar_lea.vmem %s0, %s198
        %s200 = smul.u32 2, %s18
        %s201 = smul.u32 2, %s18
        %v202 = vlaneseq
        %v203 = vand.u32 %v202, 127
        %vm204 = vcmp.ne.s32.totalorder %v203, 0
        %v205 = vsel %vm204, 1, 0
        %v206 = vcvt.s32.f32 %v205
        %vm207 = vcmp.ne.s32.totalorder %v203, 127
        %v208 = vsel %vm207, 1, 0
        %v209 = vcvt.s32.f32 %v208
        loop: start=0, step=1, limit=2
        $region37: #{conv1d_block.1} parent=35 // loop_pre_header
          _
        $region38: #{conv1d_block.1} parent=35 // loop_header
          %s211 = sphi 0, %s215
          %p212 = scmp.ge.s32.totalorder %s211, 2
        $region39: #{conv1d_block.1} parent=35 // loop_header_branch
          %214 = sbr.rel (%p212) target = $region43
        $region40: #{conv1d_block.1} parent=35 // loop_body
          %s216 = smul.u32 %s211, 16
          %s217 = scalar_lea.vmem %s199, %s216
          %v218 = vld [vmem:[%s217] sm:$0xff]
          %v219 = vld [vmem:[%s217 + $0x8] sm:$0xff]
          %v220 = vld [vmem:[%s3] sm:$0xff]
          %v221 = vld [vmem:[%s3 + $0x8] sm:$0xff]
          %223 = vset.pattern.permute.xlu0 0
          %224 = vperm.xlu0 %223, %v220
          %v225 = vpop.permute.xlu0 %224
          %228 = vset.pattern.permute.xlu0 0
          %229 = vperm.xlu0 %228, %v221
          %v230 = vpop.permute.xlu0 %229
          %v232 = vmul.f32 %v218, %v225
          %v233 = vmul.f32 %v219, %v230
          %234 = vset.pattern.permute.xlu0 1
          %235 = vperm.xlu0 %234, %v220
          %v236 = vpop.permute.xlu0 %235
          %238 = vset.pattern.permute.xlu0 1
          %239 = vperm.xlu0 %238, %v221
          %v240 = vpop.permute.xlu0 %239
          %v242 = vadd.f32 %v232, %v236
          %v243 = vadd.f32 %v233, %v240
          %v244 = vmul.f32 %v242, 0.01
          %v245 = vmul.f32 %v243, 0.01
          %v246 = vmax.f32 %v242, %v244
          %v247 = vmax.f32 %v243, %v245
          %248 = vst [vmem:[#allocation2 + $0x10] sm:$0xff] %v246
          %249 = vst [vmem:[#allocation2 + $0x18] sm:$0xff] %v247
          %250 = vrot.lane.b32.xlu0 %v246, 1
          %v251 = vpop.permute.xlu0 %250
          %252 = vrot.lane.b32.xlu0 %v247, 1
          %v253 = vpop.permute.xlu0 %252
          %v254 = vmul.f32 %v251, %v206
          %v255 = vmul.f32 %v253, %v206
          %256 = vst [vmem:[#allocation2] sm:$0xff] %v254
          %257 = vst [vmem:[#allocation2 + $0x8] sm:$0xff] %v255
          %258 = vrot.lane.b32.xlu0 %v246, 127
          %v259 = vpop.permute.xlu0 %258
          %260 = vrot.lane.b32.xlu0 %v247, 127
          %v261 = vpop.permute.xlu0 %260
          %v262 = vmul.f32 %v259, %v209
          %v263 = vmul.f32 %v261, %v209
          %264 = vst [vmem:[#allocation2 + $0x20] sm:$0xff] %v262
          %265 = vst [vmem:[#allocation2 + $0x28] sm:$0xff] %v263
          %v266 = vld [vmem:[%s1] sm:$0xff]
          %v267 = vld [vmem:[%s1 + $0x8] sm:$0xff]
          %v268 = vld [vmem:[#allocation2] sm:$0xff]
          %v269 = vld [vmem:[#allocation2 + $0x8] sm:$0xff]
          %v270 = vld [vmem:[#allocation2 + $0x10] sm:$0xff]
          %v271 = vld [vmem:[#allocation2 + $0x18] sm:$0xff]
          %v272 = vld [vmem:[#allocation2 + $0x20] sm:$0xff]
          %v273 = vld [vmem:[#allocation2 + $0x28] sm:$0xff]
          %vm274 = vcmask 392192
          %v276 = vsel %vm274, %v266, 0
          %v279 = vsel %vm274, %v267, 0
          %281 = vmatprep.subr.mxu0 0.0
          %282 = vmatpush1.msra.mxu0 %v268
          %283 = vmatprep.subr.mxu0 0.0
          %284 = vmatpush1.msra.mxu0 %v269
          %285 = vmatprep.subr.mxu0 0.0
          %286 = vmatpush1.msra.mxu0 %v270
          %287 = vmatprep.subr.mxu0 0.0
          %288 = vmatpush1.msra.mxu0 %v271
          %289 = vmatprep.subr.mxu0 0.0
          %290 = vmatpush1.msra.mxu0 %v272
          %291 = vmatprep.subr.mxu0 0.0
          %292 = vmatpush1.msra.mxu0 %v273
          %293 = vmatprep.subr.mxu0 0.0
          %294 = vmatpush1.msra.mxu0 0.0
          %295 = vmatprep.subr.mxu0 0.0
          %296 = vmatpush1.msra.mxu0 0.0
          %297 = vmatprep.subr.mxu0 0.0
          %298 = vmatpush1.msra.mxu0 0.0
          %299 = vmatprep.subr.mxu0 0.0
          %300 = vmatpush1.msra.mxu0 0.0
          %301 = vmatprep.subr.mxu0 0.0
          %302 = vmatpush1.msra.mxu0 0.0
          %303 = vmatprep.subr.mxu0 0.0
          %304 = vmatpush1.msra.mxu0 0.0
          %305 = vmatprep.subr.mxu0 0.0
          %306 = vmatpush1.msra.mxu0 0.0
          %307 = vmatprep.subr.mxu0 0.0
          %308 = vmatpush1.msra.mxu0 0.0
          %309 = vmatprep.subr.mxu0 0.0
          %310 = vmatpush1.msra.mxu0 0.0
          %311 = vmatprep.subr.mxu0 0.0
          %312 = vmatpush1.msra.mxu0 0.0
          %313 = vmatprep.subr.mxu0 0.0
          %314 = vmatpush1.msra.mxu0 0.0
          %315 = vmatprep.subr.mxu0 0.0
          %316 = vmatpush1.msra.mxu0 0.0
          %317 = vmatprep.subr.mxu0 0.0
          %318 = vmatpush1.msra.mxu0 0.0
          %319 = vmatprep.subr.mxu0 0.0
          %320 = vmatpush1.msra.mxu0 0.0
          %321 = vmatprep.subr.mxu0 0.0
          %322 = vmatpush1.msra.mxu0 0.0
          %323 = vmatprep.subr.mxu0 0.0
          %324 = vmatpush1.msra.mxu0 0.0
          %325 = vmatprep.subr.mxu0 0.0
          %326 = vmatpush1.msra.mxu0 0.0
          %327 = vmatprep.subr.mxu0 0.0
          %328 = vmatpush1.msra.mxu0 0.0
          %329 = vmatprep.subr.mxu0 0.0
          %330 = vmatpush1.msra.mxu0 0.0
          %331 = vmatprep.subr.mxu0 0.0
          %332 = vmatpush1.msra.mxu0 0.0
          %333 = vmatprep.subr.mxu0 0.0
          %334 = vmatpush1.msra.mxu0 0.0
          %335 = vmatprep.subr.mxu0 0.0
          %336 = vmatpush1.msra.mxu0 0.0
          %337 = vmatprep.subr.mxu0 0.0
          %338 = vmatpush1.msra.mxu0 0.0
          %339 = vmatprep.subr.mxu0 0.0
          %340 = vmatpush1.msra.mxu0 0.0
          %341 = vmatprep.subr.mxu0 0.0
          %342 = vmatpush1.msra.mxu0 0.0
          %343 = vmatprep.subr.mxu0 0.0
          %344 = vmatpush1.msra.mxu0 0.0
          %345 = vmatprep.mubr.f32.mxu0 0.0
          %346 = vmatmul.mubr.f32.gmra.mrb[0].mxu0 %v276
          %v347 = vpop.f32.mrb[0].mxu0
          %v348 = vadd.f32 0.0, %v347
          %v349 = vpop.f32.mrb[0].mxu0
          %350 = vmatprep.mubr.f32.mxu0 0.0
          %351 = vmatmul.mubr.f32.gmra.mrb[0].mxu0 %v279
          %v352 = vpop.f32.mrb[0].mxu0
          %v353 = vadd.f32 0.0, %v352
          %v354 = vpop.f32.mrb[0].mxu0
          %355 = vdwg.mxu0
          %v356 = vld [vmem:[%s3] sm:$0xff]
          %v357 = vld [vmem:[%s3 + $0x8] sm:$0xff]
          %359 = vset.pattern.permute.xlu0 2
          %360 = vperm.xlu0 %359, %v356
          %v361 = vpop.permute.xlu0 %360
          %364 = vset.pattern.permute.xlu0 2
          %365 = vperm.xlu0 %364, %v357
          %v366 = vpop.permute.xlu0 %365
          %v368 = vmul.f32 %v348, %v361
          %v369 = vmul.f32 %v353, %v366
          %370 = vset.pattern.permute.xlu0 3
          %371 = vperm.xlu0 %370, %v356
          %v372 = vpop.permute.xlu0 %371
          %374 = vset.pattern.permute.xlu0 3
          %375 = vperm.xlu0 %374, %v357
          %v376 = vpop.permute.xlu0 %375
          %v378 = vadd.f32 %v368, %v372
          %v379 = vadd.f32 %v369, %v376
          %v380 = vmul.f32 %v378, 0.01
          %v381 = vmul.f32 %v379, 0.01
          %v382 = vmax.f32 %v378, %v380
          %v383 = vmax.f32 %v379, %v381
          %384 = vst [vmem:[#allocation2 + $0x10] sm:$0xff] %v382
          %385 = vst [vmem:[#allocation2 + $0x18] sm:$0xff] %v383
          %386 = vrot.lane.b32.xlu0 %v382, 1
          %v387 = vpop.permute.xlu0 %386
          %388 = vrot.lane.b32.xlu0 %v383, 1
          %v389 = vpop.permute.xlu0 %388
          %v390 = vmul.f32 %v387, %v206
          %v391 = vmul.f32 %v389, %v206
          %392 = vst [vmem:[#allocation2] sm:$0xff] %v390
          %393 = vst [vmem:[#allocation2 + $0x8] sm:$0xff] %v391
          %394 = vrot.lane.b32.xlu0 %v382, 127
          %v395 = vpop.permute.xlu0 %394
          %396 = vrot.lane.b32.xlu0 %v383, 127
          %v397 = vpop.permute.xlu0 %396
          %v398 = vmul.f32 %v395, %v209
          %v399 = vmul.f32 %v397, %v209
          %400 = vst [vmem:[#allocation2 + $0x20] sm:$0xff] %v398
          %401 = vst [vmem:[#allocation2 + $0x28] sm:$0xff] %v399
          %v402 = vld [vmem:[%s2] sm:$0xff]
          %v403 = vld [vmem:[%s2 + $0x8] sm:$0xff]
          %v404 = vld [vmem:[#allocation2] sm:$0xff]
          %v405 = vld [vmem:[#allocation2 + $0x8] sm:$0xff]
          %v406 = vld [vmem:[#allocation2 + $0x10] sm:$0xff]
          %v407 = vld [vmem:[#allocation2 + $0x18] sm:$0xff]
          %v408 = vld [vmem:[#allocation2 + $0x20] sm:$0xff]
          %v409 = vld [vmem:[#allocation2 + $0x28] sm:$0xff]
          %v411 = vsel %vm274, %v402, 0
          %v414 = vsel %vm274, %v403, 0
          %416 = vmatprep.subr.mxu0 0.0
          %417 = vmatpush1.msra.mxu0 %v404
          %418 = vmatprep.subr.mxu0 0.0
          %419 = vmatpush1.msra.mxu0 %v405
          %420 = vmatprep.subr.mxu0 0.0
          %421 = vmatpush1.msra.mxu0 %v406
          %422 = vmatprep.subr.mxu0 0.0
          %423 = vmatpush1.msra.mxu0 %v407
          %424 = vmatprep.subr.mxu0 0.0
          %425 = vmatpush1.msra.mxu0 %v408
          %426 = vmatprep.subr.mxu0 0.0
          %427 = vmatpush1.msra.mxu0 %v409
          %428 = vmatprep.subr.mxu0 0.0
          %429 = vmatpush1.msra.mxu0 0.0
          %430 = vmatprep.subr.mxu0 0.0
          %431 = vmatpush1.msra.mxu0 0.0
          %432 = vmatprep.subr.mxu0 0.0
          %433 = vmatpush1.msra.mxu0 0.0
          %434 = vmatprep.subr.mxu0 0.0
          %435 = vmatpush1.msra.mxu0 0.0
          %436 = vmatprep.subr.mxu0 0.0
          %437 = vmatpush1.msra.mxu0 0.0
          %438 = vmatprep.subr.mxu0 0.0
          %439 = vmatpush1.msra.mxu0 0.0
          %440 = vmatprep.subr.mxu0 0.0
          %441 = vmatpush1.msra.mxu0 0.0
          %442 = vmatprep.subr.mxu0 0.0
          %443 = vmatpush1.msra.mxu0 0.0
          %444 = vmatprep.subr.mxu0 0.0
          %445 = vmatpush1.msra.mxu0 0.0
          %446 = vmatprep.subr.mxu0 0.0
          %447 = vmatpush1.msra.mxu0 0.0
          %448 = vmatprep.subr.mxu0 0.0
          %449 = vmatpush1.msra.mxu0 0.0
          %450 = vmatprep.subr.mxu0 0.0
          %451 = vmatpush1.msra.mxu0 0.0
          %452 = vmatprep.subr.mxu0 0.0
          %453 = vmatpush1.msra.mxu0 0.0
          %454 = vmatprep.subr.mxu0 0.0
          %455 = vmatpush1.msra.mxu0 0.0
          %456 = vmatprep.subr.mxu0 0.0
          %457 = vmatpush1.msra.mxu0 0.0
          %458 = vmatprep.subr.mxu0 0.0
          %459 = vmatpush1.msra.mxu0 0.0
          %460 = vmatprep.subr.mxu0 0.0
          %461 = vmatpush1.msra.mxu0 0.0
          %462 = vmatprep.subr.mxu0 0.0
          %463 = vmatpush1.msra.mxu0 0.0
          %464 = vmatprep.subr.mxu0 0.0
          %465 = vmatpush1.msra.mxu0 0.0
          %466 = vmatprep.subr.mxu0 0.0
          %467 = vmatpush1.msra.mxu0 0.0
          %468 = vmatprep.subr.mxu0 0.0
          %469 = vmatpush1.msra.mxu0 0.0
          %470 = vmatprep.subr.mxu0 0.0
          %471 = vmatpush1.msra.mxu0 0.0
          %472 = vmatprep.subr.mxu0 0.0
          %473 = vmatpush1.msra.mxu0 0.0
          %474 = vmatprep.subr.mxu0 0.0
          %475 = vmatpush1.msra.mxu0 0.0
          %476 = vmatprep.subr.mxu0 0.0
          %477 = vmatpush1.msra.mxu0 0.0
          %478 = vmatprep.subr.mxu0 0.0
          %479 = vmatpush1.msra.mxu0 0.0
          %480 = vmatprep.mubr.f32.mxu0 0.0
          %481 = vmatmul.mubr.f32.gmra.mrb[0].mxu0 %v411
          %v482 = vpop.f32.mrb[0].mxu0
          %v483 = vadd.f32 0.0, %v482
          %v484 = vpop.f32.mrb[0].mxu0
          %485 = vmatprep.mubr.f32.mxu0 0.0
          %486 = vmatmul.mubr.f32.gmra.mrb[0].mxu0 %v414
          %v487 = vpop.f32.mrb[0].mxu0
          %v488 = vadd.f32 0.0, %v487
          %v489 = vpop.f32.mrb[0].mxu0
          %490 = vdwg.mxu0
          %v491 = vld [vmem:[%s217] sm:$0xff]
          %v492 = vld [vmem:[%s217 + $0x8] sm:$0xff]
          %v493 = vadd.f32 %v491, %v483
          %v494 = vadd.f32 %v492, %v488
          %s495 = scalar_lea.vmem %s193, %s216 [#allocation3]
          %496 = vst [vmem:[%s495] sm:$0xff] %v493
          %497 = vst [vmem:[%s495 + $0x8] sm:$0xff] %v494
        $region41: #{conv1d_block.1} parent=35 // loop_footer
          %s215 = sadd.s32 1, %s211
        $region42: #{conv1d_block.1} parent=35 // loop_footer_branch
          %210 = sbr.rel target = $region38
        $region43: #{conv1d_block.1} parent=35 // loop_exit
          _
        %s498 = sand.u32 %s115, 1
        %s499 = scalar_lea.sflag [#allocation4], %s498
        %s500 = sand.u32 %s115, 1
        %s501 = smul.addr %s500, 32
        %s502 = scalar_lea.vmem [#allocation3], %s501
        // Predicated region
        $region44: #{conv1d_block.1} parent=35 // pred_check
          %p503 = pneg %p125
        $region45: #{conv1d_block.1} parent=35 // pred_check_branch
          %505 = sbr.rel (%p503) target = $region47
        $region46: #{conv1d_block.1} parent=35 // pred_region
          %s506 = smul.u32 2, %s18
          %s508 = ssub.s32 512, 512
          %509 = vsyncadd %s499, %s508
          %s510 = smul.addr %s506, 2
          %s511 = smul.addr %s510, 128
          %s512 = scalar_lea.hbm %s4, %s511
          %s513 = sshll.u32 %s502, 4
          %s514 = int_to_ptr.vmem [resolvable:$true] %s513
          %519 = dma.vmem_to_hbm [thread:$0]  %s514, 512, %s512, %s499, 128, 128, 8
        $region47: #{conv1d_block.1} parent=35 // pred_fallthru
          _
      $region36: #{conv1d_block.1} parent=5 // pred_fallthru
        _
      %p520 = scmp.le.s32.totalorder 2, %s13
      // Predicated region
      $region48: #{conv1d_block.1} parent=5 // pred_check
        %p521 = pneg %p520
      $region49: #{conv1d_block.1} parent=5 // pred_check_branch
        %523 = sbr.rel (%p521) target = $region51
      $region50: #{conv1d_block.1} parent=5 // pred_region
        %s524 = ssub.s32 %s13, 2
        // Predicated region
        $region52: #{conv1d_block.1} parent=50 // pred_check
          %p525 = pneg %p131
        $region53: #{conv1d_block.1} parent=50 // pred_check_branch
          %527 = sbr.rel (%p525) target = $region55
        $region54: #{conv1d_block.1} parent=50 // pred_region
          %s528 = sand.u32 %s116, 1
          %s529 = scalar_lea.sflag [#allocation4], %s528
          %s530 = sand.u32 %s116, 1
          %s531 = smul.addr %s530, 32
          %s532 = scalar_lea.vmem [#allocation3], %s531
          %533 = dma.done %s529, 512
        $region55: #{conv1d_block.1} parent=50 // pred_fallthru
          _
      $region51: #{conv1d_block.1} parent=5 // pred_fallthru
        _
    $region6: #{conv1d_block.1} parent=1 // loop_footer
      %s17 = sadd.s32 1, %s13
    $region7: #{conv1d_block.1} parent=1 // loop_footer_branch
      %12 = sbr.rel target = $region3
    $region8: #{conv1d_block.1} parent=1 // loop_exit
      _
    %534 = vsyncpa [#allocation4], 1
    %s535 = scalar_lea.sflag [#allocation4], 1
    %536 = vsyncpa %s535, 1

</llo_original>
